<compile_context>
chip_gen: v5e
topology: v5e:2x2
jax: 0.10.0
libtpu: 0.0.40
codegen_flags: <defaults>
</compile_context>

<pallas_src>
import jax
import jax.numpy as jnp
from jax.experimental import pallas as pl
from jax.experimental.pallas import tpu as pltpu

_LANES = 128


def _round_up(n, m):
    return ((n + m - 1) // m) * m


def mlp_kernel(x_ref, w1_ref, b1_ref, w2_ref, b2_ref, out_ref):
    """Fused Linear -> ReLU -> Linear on VMEM-resident tiles.

    Weights arrive pre-transposed to [in, out] (done once in prepare_params),
    so both matmuls are the MXU's preferred [M,K]x[K,N] contraction with the
    (128-padded) output-feature dim on lanes -- no in-kernel transpose.
    """
    x = x_ref[...].astype(w1_ref.dtype)                               # [Bt, I]
    h = jnp.dot(x, w1_ref[...], preferred_element_type=jnp.float32)   # [Bt, Hp]
    h = jnp.maximum(h + b1_ref[...], 0.0)                             # f32 bias + ReLU
    y = jnp.dot(h.astype(w2_ref.dtype), w2_ref[...],
                preferred_element_type=jnp.float32)                   # [Bt, Op]
    out_ref[...] = (y + b2_ref[...]).astype(out_ref.dtype)


def prepare_params(w1, b1, w2, b2, compute_dtype=jnp.float32):
    """One-time parameter prep (outside the per-call hot path).

    Takes PyTorch nn.Linear parameters (weight [out, in], bias [out]) and:
      * transposes weights to [in, out] so the kernel runs the canonical MXU
        contraction (no trans_b re-layout per grid step),
      * zero-pads hidden/output feature dims to multiples of 128 for
        lane-dense MXU passes and output stores.
    Padding is exact: padded hidden units are relu(0 + 0) = 0 and contribute
    nothing to layer 2; padded output columns are sliced off in the wrapper.

    `compute_dtype=jnp.bfloat16` is valid on ALL generations (v5e/v6e/v7x):
    the MXU runs bf16 at full rate everywhere; bias/ReLU stay f32.  Note the
    bf16 path double-rounds h (f32 accumulate -> bf16 for layer 2).
    """
    H, I = w1.shape
    O = w2.shape[0]
    Hp = _round_up(H, _LANES)
    Op = _round_up(O, _LANES)
    w1_p = jnp.zeros((I, Hp), compute_dtype).at[:, :H].set(w1.T.astype(compute_dtype))
    b1_p = jnp.zeros((1, Hp), jnp.float32).at[:, :H].set(b1.astype(jnp.float32))
    w2_p = jnp.zeros((Hp, Op), compute_dtype).at[:H, :O].set(w2.T.astype(compute_dtype))
    b2_p = jnp.zeros((1, Op), jnp.float32).at[:, :O].set(b2.astype(jnp.float32))
    return {"w1": w1_p, "b1": b1_p, "w2": w2_p, "b2": b2_p, "out_features": O}


def _const_spec(shape, single_buffer):
    """BlockSpec for a grid-invariant (weight / bias) operand."""
    if single_buffer and hasattr(pl, "Buffered"):
        # Constant index_map => loaded once; single-buffering halves its
        # resident VMEM footprint (matters on v7x 64 MiB/TC, v5e 16 MiB scoped).
        return pl.BlockSpec(shape, lambda i: (0, 0), pipeline_mode=pl.Buffered(1))
    return pl.BlockSpec(shape, lambda i: (0, 0))


def neural_network_forward(x, params, block_b=512):
    """Forward pass.  x: [B, input_size] f32, params from prepare_params."""
    w1_p, b1_p, w2_p, b2_p = params["w1"], params["b1"], params["w2"], params["b2"]
    O = params["out_features"]
    B, I = x.shape
    Hp = w1_p.shape[1]
    Op = w2_p.shape[1]

    param_bytes = sum(int(a.size) * a.dtype.itemsize
                      for a in (w1_p, b1_p, w2_p, b2_p))

    def _cost(nbatch):
        return pl.CostEstimate(
            flops=2 * nbatch * I * Hp + 2 * nbatch * Hp * Op,
            transcendentals=0,
            bytes_accessed=(nbatch * I * x.dtype.itemsize
                            + param_bytes
                            + nbatch * Op * 4))

    def _vmem_limit(needed_bytes):
        # Headroom x2, floor 32 MiB, cap at v7x's 64 MiB/TC physical VMEM.
        return int(min(max(2 * needed_bytes, 32 << 20), 64 << 20))

    if B > block_b:
        # Batch-tiled path: pad B up to a multiple of block_b so ANY large B
        # keeps double-buffered streaming + lane-dense stores (never falls
        # back to whole-batch-in-VMEM).  grid >= 2 so both v7x TCs get work.
        Bp = _round_up(B, block_b)
        xp = x if Bp == B else jnp.zeros((Bp, I), x.dtype).at[:B].set(x)
        grid = (Bp // block_b,)
        act_tile_bytes = block_b * (I * x.dtype.itemsize + Op * 4)
        vmem_limit = _vmem_limit(param_bytes + 2 * act_tile_bytes)
        cost = _cost(Bp)

        def tiled_call(single_buffer_weights):
            return pl.pallas_call(
                mlp_kernel,
                out_shape=jax.ShapeDtypeStruct((Bp, Op), jnp.float32),
                grid=grid,
                in_specs=[
                    pl.BlockSpec((block_b, I), lambda i: (i, 0)),
                    _const_spec((I, Hp), single_buffer_weights),
                    _const_spec((1, Hp), single_buffer_weights),
                    _const_spec((Hp, Op), single_buffer_weights),
                    _const_spec((1, Op), single_buffer_weights),
                ],
                out_specs=pl.BlockSpec((block_b, Op), lambda i: (i, 0)),
                compiler_params=pltpu.CompilerParams(
                    dimension_semantics=("parallel",),
                    vmem_limit_bytes=vmem_limit),
                cost_estimate=cost,
            )(xp, w1_p, b1_p, w2_p, b2_p)

        try:
            y = tiled_call(True)
        except Exception:
            # TODO(synk): pipeline_mode=pl.Buffered(1) rejected by this jax
            # build; fall back to default double-buffered weight blocks.
            y = tiled_call(False)
        if Bp != B:
            y = y[:B]
    else:
        # Small-batch path: no grid -> no software-pipeline prologue/epilogue
        # or double-buffering; single invocation on VMEM-resident operands.
        vmem_limit = _vmem_limit(
            param_bytes + B * (I * x.dtype.itemsize + Op * 4))
        vmem = pl.BlockSpec(memory_space=pltpu.MemorySpace.VMEM)
        y = pl.pallas_call(
            mlp_kernel,
            out_shape=jax.ShapeDtypeStruct((B, Op), jnp.float32),
            in_specs=[vmem] * 5,
            out_specs=vmem,
            compiler_params=pltpu.CompilerParams(vmem_limit_bytes=vmem_limit),
            cost_estimate=_cost(B),
        )(x, w1_p, b1_p, w2_p, b2_p)

    return y if Op == O else y[:, :O]

    # TODO(synk): for very large Hp/Op (weights approaching ~48 MiB on v7x),
    # add an Op-tiled "parallel" axis + Hp "arbitrary" reduction with a VMEM
    # accumulator; unnecessary at the layer sizes this module targets.


if __name__ == "__main__":
    # Small shapes consistent with the module's forward.
    batch = 8
    input_size = 32
    hidden_size = 64
    output_size = 16

    key = jax.random.PRNGKey(0)
    kx, kw1, kb1, kw2, kb2, kxl = jax.random.split(key, 6)

    # PyTorch nn.Linear parameter layout: weight [out, in], bias [out].
    x = jax.random.normal(kx, (batch, input_size), dtype=jnp.float32)
    w1 = jax.random.normal(kw1, (hidden_size, input_size), dtype=jnp.float32) * 0.1
    b1 = jax.random.normal(kb1, (hidden_size,), dtype=jnp.float32) * 0.1
    w2 = jax.random.normal(kw2, (output_size, hidden_size), dtype=jnp.float32) * 0.1
    b2 = jax.random.normal(kb2, (output_size,), dtype=jnp.float32) * 0.1

    def ref_fwd(xx):
        return jnp.maximum(xx @ w1.T + b1, 0.0) @ w2.T + b2

    # f32 params (default); gridless small-batch path.
    params_f32 = prepare_params(w1, b1, w2, b2)
    out = jax.block_until_ready(neural_network_forward(x, params_f32))
    assert out.shape == (batch, output_size)
    assert jnp.allclose(out, ref_fwd(x), atol=1e-4, rtol=1e-4)

    # Batch-tiled grid path: B=1000 is NOT a multiple of block_b=512 -> padded
    # to 1024, grid=(2,) ("parallel": one tile per v7x TensorCore), weights
    # VMEM-resident and single-buffered.
    xl = jax.random.normal(kxl, (1000, input_size), dtype=jnp.float32)
    outl = jax.block_until_ready(neural_network_forward(xl, params_f32, block_b=512))
    assert outl.shape == (1000, output_size)
    assert jnp.allclose(outl, ref_fwd(xl), atol=1e-4, rtol=1e-4)

    # bf16 weights (valid on v5e/v6e/v7x), f32 accumulation/bias/ReLU.
    params_bf16 = prepare_params(w1, b1, w2, b2, compute_dtype=jnp.bfloat16)
    out_bf16 = jax.block_until_ready(neural_network_forward(x, params_bf16))
    assert jnp.allclose(out_bf16, ref_fwd(x), atol=5e-2, rtol=5e-2)

    print("KERNEL_OK")
</pallas_src>

<mosaic_0001>
module attributes {stable_mosaic.version = 11 : i64} {
  func.func @mlp_kernel(%arg0: memref<8x32xf32, #tpu.memory_space<vmem>>, %arg1: memref<32x128xf32, #tpu.memory_space<vmem>>, %arg2: memref<1x128xf32, #tpu.memory_space<vmem>>, %arg3: memref<128x128xf32, #tpu.memory_space<vmem>>, %arg4: memref<1x128xf32, #tpu.memory_space<vmem>>, %arg5: memref<8x128xf32, #tpu.memory_space<vmem>>) attributes {dimension_semantics = [], scalar_prefetch = 0 : i64, scratch_operands = 0 : i64, tpu.core_type = #tpu.core_type<tc>} {
    %c0 = arith.constant 0 : index
    %c0_0 = arith.constant 0 : index
    %0 = vector.load %arg0[%c0, %c0_0] : memref<8x32xf32, #tpu.memory_space<vmem>>, vector<8x32xf32>
    %c0_1 = arith.constant 0 : index
    %c0_2 = arith.constant 0 : index
    %1 = vector.load %arg1[%c0_1, %c0_2] : memref<32x128xf32, #tpu.memory_space<vmem>>, vector<32x128xf32>
    %cst = arith.constant dense<0.000000e+00> : vector<8x128xf32>
    %2 = tpu.matmul %0, %1, %cst {dimension_numbers = #tpu.dot_dimension_numbers<[1], [0], [0], [1], [0, 0, 1, 1], [], []>} : vector<8x32xf32>, vector<32x128xf32>, vector<8x128xf32> -> vector<8x128xf32>
    %c0_3 = arith.constant 0 : index
    %c0_4 = arith.constant 0 : index
    %3 = vector.load %arg2[%c0_3, %c0_4] : memref<1x128xf32, #tpu.memory_space<vmem>>, vector<1x128xf32>
    %4 = vector.broadcast %3 : vector<1x128xf32> to vector<8x128xf32>
    %5 = arith.addf %2, %4 : vector<8x128xf32>
    %cst_5 = arith.constant 0.000000e+00 : f32
    %6 = vector.broadcast %cst_5 : f32 to vector<8x128xf32>
    %7 = arith.maximumf %5, %6 : vector<8x128xf32>
    %c0_6 = arith.constant 0 : index
    %c0_7 = arith.constant 0 : index
    %8 = vector.load %arg3[%c0_6, %c0_7] : memref<128x128xf32, #tpu.memory_space<vmem>>, vector<128x128xf32>
    %cst_8 = arith.constant dense<0.000000e+00> : vector<8x128xf32>
    %9 = tpu.matmul %7, %8, %cst_8 {dimension_numbers = #tpu.dot_dimension_numbers<[1], [0], [0], [1], [0, 0, 1, 1], [], []>} : vector<8x128xf32>, vector<128x128xf32>, vector<8x128xf32> -> vector<8x128xf32>
    %c0_9 = arith.constant 0 : index
    %c0_10 = arith.constant 0 : index
    %10 = vector.load %arg4[%c0_9, %c0_10] : memref<1x128xf32, #tpu.memory_space<vmem>>, vector<1x128xf32>
    %11 = vector.broadcast %10 : vector<1x128xf32> to vector<8x128xf32>
    %12 = arith.addf %9, %11 : vector<8x128xf32>
    %c0_11 = arith.constant 0 : index
    %c0_12 = arith.constant 0 : index
    %13 = vector.load %arg5[%c0_11, %c0_12] : memref<8x128xf32, #tpu.memory_space<vmem>>, vector<8x128xf32>
    tpu.vector_store %arg5[%c0_11, %c0_12], %12 {strides = array<i32>} : memref<8x128xf32, #tpu.memory_space<vmem>>, vector<8x128xf32>,
    return
  }
}

</mosaic_0001>

<llo_original>
// kernel: tpu_custom_call.1
$region0: #{tpu_custom_call.1}
  #allocation0 [shape = 'u32[]', space=smem, size = 0x4, offset = 0x4, fixed_abs, tag = 'smem constant byte address 0x4 - core index']
  #allocation1 [shape = 'u32[72,128]{1,0:T(1,128)}', space=vmem, size = 0x9000, scoped, tag = 'internal scratch']
  %s0 = inlined_call_operand.hbm [shape: f32[8,32], index: 0, kind: input, shape index: {}]
  %s1 = inlined_call_operand.hbm [shape: f32[32,128], index: 1, kind: input, shape index: {}]
  %s2 = inlined_call_operand.vmem [shape: f32[1,128], index: 2, kind: input, shape index: {}]
  %s3 = inlined_call_operand.hbm [shape: f32[128,128], index: 3, kind: input, shape index: {}]
  %s4 = inlined_call_operand.vmem [shape: f32[1,128], index: 4, kind: input, shape index: {}]
  %s5 = inlined_call_operand.hbm [shape: f32[8,128], index: 5, kind: output, shape index: {}]
  %s6 = sld [smem:[#allocation0]]
  $region42: #{tpu_custom_call.1} parent=0
    _
  %s8 = ssub.s32 1, %s6
  %s9 = scalar_select 0, %s8, %s6
  $region1: #{tpu_custom_call.1} parent=0
    #allocation2 [shape = 'u8[4096]{0}', space=vmem, size = 0x1000, scoped, tag = 'input window, operand 0, single buffered']
    #allocation3 [shape = 's32[1]{0}', space=sflag, size = 0x4, scoped, tag = 'scoped memory for tpu_custom_call.1']
    #allocation4 [shape = 's32[1]{0}', space=sflag, size = 0x4, scoped, tag = 'scoped memory for tpu_custom_call.1']
    #allocation5 [shape = 'u8[16384]{0}', space=vmem, size = 0x4000, scoped, tag = 'input window, operand 1, single buffered']
    #allocation6 [shape = 's32[1]{0}', space=sflag, size = 0x4, scoped, tag = 'scoped memory for tpu_custom_call.1']
    #allocation7 [shape = 'u8[65536]{0}', space=vmem, size = 0x10000, scoped, tag = 'input window, operand 3, single buffered']
    #allocation8 [shape = 'u8[4096]{0}', space=vmem, size = 0x1000, scoped, tag = 'output window, operand 0, single buffered']
    %10 = vsyncpa [#allocation3], 0
    %11 = vsyncpa [#allocation6], 0
    %12 = vsyncpa [#allocation4], 0
    // Predicated region
    $region2: #{tpu_custom_call.1} parent=1 // pred_check
      _
    $region3: #{tpu_custom_call.1} parent=1 // pred_check_branch
      %14 = sbr.rel (0) target = $region5
    $region4: #{tpu_custom_call.1} parent=1 // pred_region
      %16 = vsyncadd [#allocation3], 0
      %s18 = sshll.u32 %s0, 4
      %s19 = int_to_ptr.hbm [resolvable:$true] %s18
      %s20 = sshll.u32 [#allocation2], 4
      %s21 = int_to_ptr.vmem [resolvable:$true] %s20
      %23 = dma.hbm_to_vmem [thread:$0]  %s19, 128, %s21, [#allocation3]
    $region5: #{tpu_custom_call.1} parent=1 // pred_fallthru
      _
    // Predicated region
    $region6: #{tpu_custom_call.1} parent=1 // pred_check
      _
    $region7: #{tpu_custom_call.1} parent=1 // pred_check_branch
      %25 = sbr.rel (0) target = $region9
    $region8: #{tpu_custom_call.1} parent=1 // pred_region
      %27 = vsyncadd [#allocation6], 0
      %s28 = sshll.u32 %s1, 4
      %s29 = int_to_ptr.hbm [resolvable:$true] %s28
      %s30 = sshll.u32 [#allocation5], 4
      %s31 = int_to_ptr.vmem [resolvable:$true] %s30
      %36 = dma.hbm_to_vmem [thread:$0]  %s29, 512, %s31, [#allocation6], 128, 128, 8
    $region9: #{tpu_custom_call.1} parent=1 // pred_fallthru
      _
    // Predicated region
    $region10: #{tpu_custom_call.1} parent=1 // pred_check
      _
    $region11: #{tpu_custom_call.1} parent=1 // pred_check_branch
      %38 = sbr.rel (0) target = $region13
    $region12: #{tpu_custom_call.1} parent=1 // pred_region
      _
    $region13: #{tpu_custom_call.1} parent=1 // pred_fallthru
      _
    // Predicated region
    $region14: #{tpu_custom_call.1} parent=1 // pred_check
      _
    $region15: #{tpu_custom_call.1} parent=1 // pred_check_branch
      %40 = sbr.rel (0) target = $region17
    $region16: #{tpu_custom_call.1} parent=1 // pred_region
      %42 = vsyncadd [#allocation6], 0
      %s43 = sshll.u32 %s3, 4
      %s44 = int_to_ptr.hbm [resolvable:$true] %s43
      %s45 = sshll.u32 [#allocation7], 4
      %s46 = int_to_ptr.vmem [resolvable:$true] %s45
      %51 = dma.hbm_to_vmem [thread:$0]  %s44, 2048, %s46, [#allocation6], 128, 128, 8
    $region17: #{tpu_custom_call.1} parent=1 // pred_fallthru
      _
    // Predicated region
    $region18: #{tpu_custom_call.1} parent=1 // pred_check
      _
    $region19: #{tpu_custom_call.1} parent=1 // pred_check_branch
      %53 = sbr.rel (0) target = $region21
    $region20: #{tpu_custom_call.1} parent=1 // pred_region
      _
    $region21: #{tpu_custom_call.1} parent=1 // pred_fallthru
      _
    // Predicated region
    $region22: #{tpu_custom_call.1} parent=1 // pred_check
      _
    $region23: #{tpu_custom_call.1} parent=1 // pred_check_branch
      %55 = sbr.rel (0) target = $region25
    $region24: #{tpu_custom_call.1} parent=1 // pred_region
      %57 = dma.done [#allocation3], 128
    $region25: #{tpu_custom_call.1} parent=1 // pred_fallthru
      _
    // Predicated region
    $region26: #{tpu_custom_call.1} parent=1 // pred_check
      _
    $region27: #{tpu_custom_call.1} parent=1 // pred_check_branch
      %59 = sbr.rel (0) target = $region29
    $region28: #{tpu_custom_call.1} parent=1 // pred_region
      %61 = dma.done [#allocation6], 512
    $region29: #{tpu_custom_call.1} parent=1 // pred_fallthru
      _
    // Predicated region
    $region30: #{tpu_custom_call.1} parent=1 // pred_check
      _
    $region31: #{tpu_custom_call.1} parent=1 // pred_check_branch
      %63 = sbr.rel (0) target = $region33
    $region32: #{tpu_custom_call.1} parent=1 // pred_region
      %65 = dma.done [#allocation6], 2048
    $region33: #{tpu_custom_call.1} parent=1 // pred_fallthru
      _
    %v66 = vld [vmem:[#allocation2] sm:$0xff]
    %v67 = vld [vmem:[#allocation5] sm:$0xff]
    %v68 = vld [vmem:[#allocation5 + $0x8] sm:$0xff]
    %v69 = vld [vmem:[#allocation5 + $0x10] sm:$0xff]
    %v70 = vld [vmem:[#allocation5 + $0x18] sm:$0xff]
    %v71 = vld [vmem:[%s2] sm:$0x1]
    %v73 = vperm.slane %v71, 0
    %vm75 = vcmask 261120
    %v77 = vsel %vm75, %v66, 0
    %79 = vmatpush.msra.mxu0 0.0
    %80 = vmatpush.msra.mxu0 0.0
    %81 = vmatpush.msra.mxu0 0.0
    %82 = vmatpush.msra.mxu0 0.0
    %83 = vmatpush.msra.mxu0 0.0
    %84 = vmatpush.msra.mxu0 0.0
    %85 = vmatpush.msra.mxu0 0.0
    %86 = vmatpush.msra.mxu0 0.0
    %87 = vmatpush.msra.mxu0 0.0
    %88 = vmatpush.msra.mxu0 0.0
    %89 = vmatpush.msra.mxu0 0.0
    %90 = vmatpush.msra.mxu0 0.0
    %91 = vmatpush.msra.mxu0 %v70
    %92 = vmatpush.msra.mxu0 %v69
    %93 = vmatpush.msra.mxu0 %v68
    %94 = vmatpush.msra.mxu0 %v67
    %95 = vmatmul.f32.gmra.mxu0 %v77
    %v96 = vpop.f32.mrf.mxu0
    %v97 = vadd.f32 %v73, %v96
    %98 = vdwg.mxu0
    %v99 = vmax.f32 %v97, 0.0
    %v100 = vld [vmem:[#allocation7] sm:$0xff]
    %v101 = vld [vmem:[#allocation7 + $0x8] sm:$0xff]
    %v102 = vld [vmem:[#allocation7 + $0x10] sm:$0xff]
    %v103 = vld [vmem:[#allocation7 + $0x18] sm:$0xff]
    %v104 = vld [vmem:[#allocation7 + $0x20] sm:$0xff]
    %v105 = vld [vmem:[#allocation7 + $0x28] sm:$0xff]
    %v106 = vld [vmem:[#allocation7 + $0x30] sm:$0xff]
    %v107 = vld [vmem:[#allocation7 + $0x38] sm:$0xff]
    %v108 = vld [vmem:[#allocation7 + $0x40] sm:$0xff]
    %v109 = vld [vmem:[#allocation7 + $0x48] sm:$0xff]
    %v110 = vld [vmem:[#allocation7 + $0x50] sm:$0xff]
    %v111 = vld [vmem:[#allocation7 + $0x58] sm:$0xff]
    %v112 = vld [vmem:[#allocation7 + $0x60] sm:$0xff]
    %v113 = vld [vmem:[#allocation7 + $0x68] sm:$0xff]
    %v114 = vld [vmem:[#allocation7 + $0x70] sm:$0xff]
    %v115 = vld [vmem:[#allocation7 + $0x78] sm:$0xff]
    %v116 = vld [vmem:[%s4] sm:$0x1]
    %v118 = vperm.slane %v116, 0
    %120 = vmatpush.msra.mxu0 %v115
    %121 = vmatpush.msra.mxu0 %v114
    %122 = vmatpush.msra.mxu0 %v113
    %123 = vmatpush.msra.mxu0 %v112
    %124 = vmatpush.msra.mxu0 %v111
    %125 = vmatpush.msra.mxu0 %v110
    %126 = vmatpush.msra.mxu0 %v109
    %127 = vmatpush.msra.mxu0 %v108
    %128 = vmatpush.msra.mxu0 %v107
    %129 = vmatpush.msra.mxu0 %v106
    %130 = vmatpush.msra.mxu0 %v105
    %131 = vmatpush.msra.mxu0 %v104
    %132 = vmatpush.msra.mxu0 %v103
    %133 = vmatpush.msra.mxu0 %v102
    %134 = vmatpush.msra.mxu0 %v101
    %135 = vmatpush.msra.mxu0 %v100
    %136 = vmatmul.f32.gmra.mxu0 %v99
    %v137 = vpop.f32.mrf.mxu0
    %v138 = vadd.f32 %v118, %v137
    %139 = vdwg.mxu0
    %140 = vst [vmem:[#allocation8] sm:$0xff] %v138
    // Predicated region
    $region34: #{tpu_custom_call.1} parent=1 // pred_check
      _
    $region35: #{tpu_custom_call.1} parent=1 // pred_check_branch
      %142 = sbr.rel (0) target = $region37
    $region36: #{tpu_custom_call.1} parent=1 // pred_region
      %144 = vsyncadd [#allocation4], 0
      %s146 = sshll.u32 [#allocation8], 4
      %s147 = int_to_ptr.vmem [resolvable:$true] %s146
      %s148 = sshll.u32 %s5, 4
      %s149 = int_to_ptr.hbm [resolvable:$true] %s148
      %151 = dma.vmem_to_hbm [thread:$0]  %s147, 128, %s149, [#allocation4]
    $region37: #{tpu_custom_call.1} parent=1 // pred_fallthru
      _
    // Predicated region
    $region38: #{tpu_custom_call.1} parent=1 // pred_check
      _
    $region39: #{tpu_custom_call.1} parent=1 // pred_check_branch
      %153 = sbr.rel (0) target = $region41
    $region40: #{tpu_custom_call.1} parent=1 // pred_region
      %155 = dma.done [#allocation4], 128
    $region41: #{tpu_custom_call.1} parent=1 // pred_fallthru
      _
    %156 = vsyncpa [#allocation3], 1
    %157 = vsyncpa [#allocation6], 1
    %158 = vsyncpa [#allocation4], 1

</llo_original>
